<compile_context>
chip_gen: v7x
topology: tpu7x:2x2x1
jax: 0.10.0
libtpu: 0.0.40
codegen_flags: <defaults>
</compile_context>

<pallas_src>
import functools

import numpy as np

import jax
import jax.numpy as jnp
from jax import lax
from jax.experimental import pallas as pl
from jax.experimental.pallas import tpu as pltpu


_DEFAULT_BLOCK_ROWS = 4096  # 4096 rows x 128 lanes -> 2 MiB per f32 block (1 MiB bf16)
_LANES = 128


def _fused_norm_kernel(blk_lo_ref, blk_hi_ref, bounds_ref, first_blk_ref,
                       x_ref, sums_ref, *, p, block_elems):
    """One grid step = one (tr, 128) block of the concatenated weight slab.

    Accumulates sum(|x|^p) per weight tensor into the SMEM output vector
    `sums_ref` (overwrite on the tensor's first block, add afterwards).
    """
    b = pl.program_id(0)

    x = x_ref[...].astype(jnp.float32)
    if p == 2:
        val = x * x
    elif p == 1:
        val = jnp.abs(x)
    else:
        val = jnp.abs(x) ** p

    lo_t = blk_lo_ref[b]          # first tensor overlapping this block
    hi_t = blk_hi_ref[b]          # last tensor overlapping this block (inclusive)
    blk_start = b * block_elems
    blk_end = blk_start + block_elems

    def _accum(t, s):
        prev = sums_ref[t]
        # Overwrite on the tensor's first block (no init pass / no stale reads).
        sums_ref[t] = jnp.where(first_blk_ref[t] == b, s, prev + s)

    single = jnp.logical_and(
        lo_t == hi_t,
        jnp.logical_and(bounds_ref[lo_t] <= blk_start,
                        bounds_ref[lo_t + 1] >= blk_end))

    # Fast path: block fully inside one tensor -> no masking, VPU + reduce only.
    @pl.when(single)
    def _():
        _accum(lo_t, jnp.sum(val))

    # Slow path: block spans tensor boundaries and/or the zero-padded tail.
    @pl.when(jnp.logical_not(single))
    def _():
        tr, lanes = val.shape
        ridx = lax.broadcasted_iota(jnp.int32, (tr, lanes), 0)
        lidx = lax.broadcasted_iota(jnp.int32, (tr, lanes), 1)
        gidx = blk_start + ridx * lanes + lidx   # global element index

        def body(t, carry):
            seg_lo = bounds_ref[t]
            seg_hi = bounds_ref[t + 1]
            mask = jnp.logical_and(gidx >= seg_lo, gidx < seg_hi)
            _accum(t, jnp.sum(jnp.where(mask, val, 0.0)))
            return carry

        lax.fori_loop(lo_t, hi_t + 1, body, 0)


def regularization_sums_pallas(weights, p=2, block_rows=_DEFAULT_BLOCK_ROWS):
    """Per-tensor sum(|w|^p) for a list of weight arrays, in a single pallas_call."""
    weights = list(weights)
    assert weights, "need at least one weight tensor"
    num_t = len(weights)

    sizes = [int(w.size) for w in weights]
    assert all(s > 0 for s in sizes), "zero-size weights must be filtered out"

    bounds = np.zeros(num_t + 1, dtype=np.int64)
    bounds[1:] = np.cumsum(sizes)
    total = int(bounds[-1])

    # Row tile: big (multi-MiB) blocks for large models, whole slab for tiny ones.
    block_rows = max(8, (int(block_rows) + 7) // 8 * 8)
    rows_needed = (((total + _LANES - 1) // _LANES) + 7) // 8 * 8
    tr = min(block_rows, rows_needed)
    block_elems = tr * _LANES
    num_blocks = (total + block_elems - 1) // block_elems
    padded = num_blocks * block_elems
    rows = padded // _LANES
    assert padded < 2**31, "int32 element indexing would overflow"

    # Static (trace-time) segment tables -> scalar prefetch (SMEM) arrays.
    starts = bounds[:-1]
    ends = bounds[1:]
    blk_starts = np.arange(num_blocks, dtype=np.int64) * block_elems
    blk_ends = blk_starts + block_elems
    blk_lo = np.searchsorted(ends, blk_starts, side="right").astype(np.int32)
    blk_hi = (np.searchsorted(starts, blk_ends, side="left") - 1).astype(np.int32)
    first_blk = (starts // block_elems).astype(np.int32)

    # Single fused concat (native dtype, tail zeros included -> no extra pad pass).
    cat_dtype = jnp.result_type(*[w.dtype for w in weights])
    flats = [w.reshape(-1) for w in weights]
    pad = padded - total
    if pad:
        flats.append(jnp.zeros((pad,), cat_dtype))
    slab = jnp.concatenate(flats, axis=0).reshape(rows, _LANES)

    grid_spec = pltpu.PrefetchScalarGridSpec(
        num_scalar_prefetch=4,
        grid=(num_blocks,),
        in_specs=[pl.BlockSpec((tr, _LANES), lambda b, *_: (b, 0))],
        out_specs=pl.BlockSpec(memory_space=pltpu.SMEM),
    )

    sums = pl.pallas_call(
        functools.partial(_fused_norm_kernel, p=p, block_elems=block_elems),
        out_shape=jax.ShapeDtypeStruct((num_t,), jnp.float32),
        grid_spec=grid_spec,
        compiler_params=pltpu.CompilerParams(
            dimension_semantics=("arbitrary",),
            vmem_limit_bytes=32 * 1024 * 1024),
    )(jnp.asarray(blk_lo), jnp.asarray(blk_hi),
      jnp.asarray(bounds.astype(np.int32)), jnp.asarray(first_blk),
      slab)
    return sums


@functools.partial(jax.jit, static_argnames=("p", "block_rows"))
def regularization_loss(weights, weight_decay, *, p=2, block_rows=_DEFAULT_BLOCK_ROWS):
    """weight_decay * sum_i ||w_i||_p over a tuple of weight arrays."""
    weights = [w for w in weights if w.size > 0]
    wd = jnp.asarray(weight_decay, jnp.float32)
    if not weights:
        return wd * jnp.float32(0.0)
    sums = regularization_sums_pallas(weights, p=p, block_rows=block_rows)
    if p == 2:
        norms = jnp.sqrt(sums)
    elif p == 1:
        norms = sums
    else:
        norms = sums ** (1.0 / p)
    return wd * jnp.sum(norms)


class Regularization:
    """JAX/Pallas counterpart of the PyTorch Regularization module.

    `named_weights` plays the role of `model.named_parameters()` filtered on
    'weight' in the name (see get_weight in the reference module).
    """

    def __init__(self, named_weights, weight_decay, p=2):
        assert weight_decay > 0, "param weight_decay can not <=0"
        self.weight_decay = float(weight_decay)
        self.p = p
        self.weight_list = self.get_weight(named_weights)
        self.weight_info(self.weight_list)

    @staticmethod
    def get_weight(named_params):
        return [(name, w) for name, w in named_params if "weight" in name]

    @staticmethod
    def weight_info(weight_list):
        print("---------------regularization weight---------------")
        for name, _ in weight_list:
            print(name)
        print("---------------------------------------------------")

    def __call__(self, named_weights):
        self.weight_list = self.get_weight(named_weights)
        weights = tuple(w for _, w in self.weight_list)
        return regularization_loss(weights, jnp.float32(self.weight_decay), p=self.p)


if __name__ == "__main__":
    key = jax.random.PRNGKey(0)
    ks = jax.random.split(key, 8)

    # Deterministic synthetic "model" parameters (MobileNetV2-flavoured, small).
    # Conv weights are in PyTorch NCHW-conv layout (Cout, Cin, kH, kW); the kernel
    # only consumes their flattened values, so layout does not affect the norm.
    named_params = [
        ("features.0.conv.weight", 0.05 * jax.random.normal(ks[0], (8, 3, 3, 3), jnp.float32)),
        ("features.0.bn.weight",   1.0 + 0.01 * jax.random.normal(ks[1], (8,), jnp.float32)),
        ("features.0.bn.bias",     jnp.zeros((8,), jnp.float32)),          # filtered out (no 'weight')
        ("features.1.dwconv.weight", 0.05 * jax.random.normal(ks[2], (8, 1, 3, 3), jnp.float32)),
        ("features.1.pwconv.weight", 0.05 * jax.random.normal(ks[3], (16, 8, 1, 1), jnp.float32)),
        ("features.1.bn.weight",   1.0 + 0.01 * jax.random.normal(ks[4], (16,), jnp.float32)),
        ("classifier.weight",      0.05 * jax.random.normal(ks[5], (10, 16), jnp.float32)),
        ("classifier.bias",        jnp.zeros((10,), jnp.float32)),         # filtered out (no 'weight')
    ]

    weight_decay = 1e-3
    reg = Regularization(named_params, weight_decay=weight_decay, p=2)

    loss = reg(named_params)
    loss = jax.block_until_ready(loss)

    # Pure-JAX reference: wd * sum_i ||w_i||_2
    ref = weight_decay * sum(
        jnp.linalg.norm(w.reshape(-1)) for name, w in named_params if "weight" in name
    )
    assert jnp.allclose(loss, ref, rtol=1e-5, atol=1e-6), (loss, ref)

    # Second check: small block_rows forces multiple blocks, exercising the
    # mask-free single-segment fast path and cross-block accumulation.
    wts = [0.1 * jax.random.normal(ks[6], (40, 128), jnp.float32),   # 5120 elems = 5 full 8x128 blocks
           1.0 + 0.01 * jax.random.normal(ks[7], (16,), jnp.float32)]
    sums = regularization_sums_pallas(wts, p=2, block_rows=8)
    sums = jax.block_until_ready(sums)
    ref_sums = jnp.stack([jnp.sum(jnp.square(w.astype(jnp.float32).reshape(-1))) for w in wts])
    assert jnp.allclose(sums, ref_sums, rtol=1e-5, atol=1e-6), (sums, ref_sums)

    print("KERNEL_OK")
</pallas_src>

<mosaic_0001>
module attributes {stable_mosaic.version = 11 : i64} {
  func.func @_fused_norm_kernel(%arg0: i32, %arg1: memref<1xi32, #tpu.memory_space<smem>>, %arg2: memref<1xi32, #tpu.memory_space<smem>>, %arg3: memref<7xi32, #tpu.memory_space<smem>>, %arg4: memref<6xi32, #tpu.memory_space<smem>>, %arg5: memref<8x128xf32, #tpu.memory_space<vmem>>, %arg6: memref<6xf32, #tpu.memory_space<smem>>) attributes {dimension_semantics = [#tpu.dimension_semantics<arbitrary>], iteration_bounds = array<i64: 1>, scalar_prefetch = 4 : i64, scratch_operands = 0 : i64, tpu.core_type = #tpu.core_type<tc>, window_params = [{transform_indices = @transform_0, window_bounds = array<i64: 8, 128>}, {transform_indices = @transform_1, window_bounds = array<i64: 6>}]} {
    %c0 = arith.constant 0 : index
    %c0_0 = arith.constant 0 : index
    %0 = vector.load %arg5[%c0, %c0_0] : memref<8x128xf32, #tpu.memory_space<vmem>>, vector<8x128xf32>
    %1 = arith.mulf %0, %0 : vector<8x128xf32>
    %2 = arith.index_cast %arg0 : i32 to index
    %3 = memref.load %arg1[%2] : memref<1xi32, #tpu.memory_space<smem>>
    %4 = arith.index_cast %arg0 : i32 to index
    %5 = memref.load %arg2[%4] : memref<1xi32, #tpu.memory_space<smem>>
    %c1024_i32 = arith.constant 1024 : i32
    %6 = arith.muli %arg0, %c1024_i32 : i32
    %c1024_i32_1 = arith.constant 1024 : i32
    %7 = arith.addi %6, %c1024_i32_1 : i32
    %8 = arith.cmpi eq, %3, %5 : i32
    %9 = arith.index_cast %3 : i32 to index
    %10 = memref.load %arg3[%9] : memref<7xi32, #tpu.memory_space<smem>>
    %11 = arith.cmpi sle, %10, %6 : i32
    %c1_i32 = arith.constant 1 : i32
    %12 = arith.addi %3, %c1_i32 : i32
    %13 = arith.index_cast %12 : i32 to index
    %14 = memref.load %arg3[%13] : memref<7xi32, #tpu.memory_space<smem>>
    %15 = arith.cmpi sge, %14, %7 : i32
    %16 = arith.andi %11, %15 : i1
    %17 = arith.andi %8, %16 : i1
    %18 = arith.extui %17 : i1 to i32
    %c0_i32 = arith.constant 0 : i32
    %19 = arith.cmpi ne, %18, %c0_i32 : i32
    scf.if %19 {
      %23 = vector.shape_cast %1 : vector<8x128xf32> to vector<1x8x128xf32>
      %cst = arith.constant dense<0.000000e+00> : vector<1xf32>
      %24 = vector.multi_reduction <add>, %23, %cst [1, 2] : vector<1x8x128xf32> to vector<1xf32>
      %25 = vector.shape_cast %24 : vector<1xf32> to vector<1x1x1xf32>
      %26 = vector.extract %25[0, 0, 0] : f32 from vector<1x1x1xf32>
      %27 = arith.index_cast %3 : i32 to index
      %28 = memref.load %arg6[%27] : memref<6xf32, #tpu.memory_space<smem>>
      %29 = arith.index_cast %3 : i32 to index
      %30 = memref.load %arg4[%29] : memref<6xi32, #tpu.memory_space<smem>>
      %31 = arith.cmpi eq, %30, %arg0 : i32
      %32 = arith.addf %28, %26 : f32
      %33 = arith.select %31, %26, %32 : f32
      %34 = arith.index_cast %3 : i32 to index
      %35 = memref.load %arg6[%34] : memref<6xf32, #tpu.memory_space<smem>>
      memref.store %33, %arg6[%34] : memref<6xf32, #tpu.memory_space<smem>>
    } else {
    }
    %true = arith.constant true
    %20 = arith.xori %17, %true : i1
    %21 = arith.extui %20 : i1 to i32
    %c0_i32_2 = arith.constant 0 : i32
    %22 = arith.cmpi ne, %21, %c0_i32_2 : i32
    scf.if %22 {
      %23 = tpu.iota {dimensions = array<i32: 0>} : vector<8x128xi32>
      %24 = tpu.iota {dimensions = array<i32: 1>} : vector<8x128xi32>
      %c128_i32 = arith.constant 128 : i32
      %25 = vector.broadcast %c128_i32 : i32 to vector<8x128xi32>
      %26 = arith.muli %23, %25 : vector<8x128xi32>
      %27 = vector.broadcast %6 : i32 to vector<8x128xi32>
      %28 = arith.addi %27, %26 : vector<8x128xi32>
      %29 = arith.addi %28, %24 : vector<8x128xi32>
      %c1_i32_3 = arith.constant 1 : i32
      %30 = arith.addi %5, %c1_i32_3 : i32
      %c0_i32_4 = arith.constant 0 : i32
      %31 = arith.subi %30, %3 : i32
      %32 = arith.addi %3, %31 : i32
      %c1_i32_5 = arith.constant 1 : i32
      scf.for %arg7 = %3 to %32 step %c1_i32_5  : i32 {
        %33 = arith.index_cast %arg7 : i32 to index
        %34 = memref.load %arg3[%33] : memref<7xi32, #tpu.memory_space<smem>>
        %c1_i32_6 = arith.constant 1 : i32
        %35 = arith.addi %arg7, %c1_i32_6 : i32
        %36 = arith.index_cast %35 : i32 to index
        %37 = memref.load %arg3[%36] : memref<7xi32, #tpu.memory_space<smem>>
        %38 = vector.broadcast %34 : i32 to vector<8x128xi32>
        %39 = arith.cmpi sge, %29, %38 : vector<8x128xi32>
        %40 = vector.broadcast %37 : i32 to vector<8x128xi32>
        %41 = arith.cmpi slt, %29, %40 : vector<8x128xi32>
        %42 = arith.andi %39, %41 : vector<8x128xi1>
        %cst = arith.constant 0.000000e+00 : f32
        %43 = vector.broadcast %cst : f32 to vector<8x128xf32>
        %44 = arith.select %42, %1, %43 : vector<8x128xi1>, vector<8x128xf32>
        %45 = vector.shape_cast %44 : vector<8x128xf32> to vector<1x8x128xf32>
        %cst_7 = arith.constant dense<0.000000e+00> : vector<1xf32>
        %46 = vector.multi_reduction <add>, %45, %cst_7 [1, 2] : vector<1x8x128xf32> to vector<1xf32>
        %47 = vector.shape_cast %46 : vector<1xf32> to vector<1x1x1xf32>
        %48 = vector.extract %47[0, 0, 0] : f32 from vector<1x1x1xf32>
        %49 = arith.index_cast %arg7 : i32 to index
        %50 = memref.load %arg6[%49] : memref<6xf32, #tpu.memory_space<smem>>
        %51 = arith.index_cast %arg7 : i32 to index
        %52 = memref.load %arg4[%51] : memref<6xi32, #tpu.memory_space<smem>>
        %53 = arith.cmpi eq, %52, %arg0 : i32
        %54 = arith.addf %50, %48 : f32
        %55 = arith.select %53, %48, %54 : f32
        %56 = arith.index_cast %arg7 : i32 to index
        %57 = memref.load %arg6[%56] : memref<6xf32, #tpu.memory_space<smem>>
        memref.store %55, %arg6[%56] : memref<6xf32, #tpu.memory_space<smem>>
      }
    } else {
    }
    return
  }
  func.func @transform_0(%arg0: i32, %arg1: memref<1xi32, #tpu.memory_space<smem>>, %arg2: memref<1xi32, #tpu.memory_space<smem>>, %arg3: memref<7xi32, #tpu.memory_space<smem>>, %arg4: memref<6xi32, #tpu.memory_space<smem>>) -> (i32, i32) {
    %c0_i32 = arith.constant 0 : i32
    %c0_i32_0 = arith.constant 0 : i32
    return %arg0, %c0_i32 : i32, i32
  }
  func.func @transform_1(%arg0: i32, %arg1: memref<1xi32, #tpu.memory_space<smem>>, %arg2: memref<1xi32, #tpu.memory_space<smem>>, %arg3: memref<7xi32, #tpu.memory_space<smem>>, %arg4: memref<6xi32, #tpu.memory_space<smem>>) -> i32 {
    %c0_i32 = arith.constant 0 : i32
    %c0_i32_0 = arith.constant 0 : i32
    return %c0_i32 : i32
  }
}

</mosaic_0001>

<llo_original>
// kernel: regularization_loss.1
$region0: #{regularization_loss.1}
  #allocation0 [shape = 'u32[]', space=smem, size = 0x4, offset = 0x4, fixed_abs, tag = 'smem constant byte address 0x4 - core index']
  #allocation1 [shape = 'u32[144,128]{1,0:T(1,128)}', space=vmem, size = 0x12000, scoped, tag = 'internal scratch']
  #allocation2 [shape = 's32[1]{0}', space=sflag, size = 0x4, scoped, tag = 'scoped memory for regularization_loss.1']
  #allocation3 [shape = 's32[1]{0:T(128)S(6)}', space=smem, size = 0x200, scoped, tag = 'prefetched SMEM operand 0']
  #allocation4 [shape = 's32[1]{0:T(128)S(6)}', space=smem, size = 0x200, scoped, tag = 'prefetched SMEM operand 1']
  #allocation5 [shape = 'u8[512]{0}', space=smem, size = 0x200, scoped, tag = 'prefetched SMEM operand 2']
  #allocation6 [shape = 'u8[512]{0}', space=smem, size = 0x200, scoped, tag = 'prefetched SMEM operand 3']
  %s0 = inlined_call_operand.<no memory space> [shape: s32[1], index: 0, kind: input, shape index: {}]
  %s1 = inlined_call_operand.<no memory space> [shape: s32[1], index: 1, kind: input, shape index: {}]
  %s2 = inlined_call_operand.vmem [shape: s32[7], index: 2, kind: input, shape index: {}]
  %s3 = inlined_call_operand.vmem [shape: s32[6], index: 3, kind: input, shape index: {}]
  %s4 = inlined_call_operand.vmem [shape: f32[8,128], index: 4, kind: input, shape index: {}]
  %s5 = inlined_call_operand.vmem [shape: f32[6], index: 5, kind: output, shape index: {}]
  %s6 = sld [smem:[#allocation0]]
  $region29: #{regularization_loss.1} parent=0
    _
  %s8 = ssub.s32 1, %s6
  %s9 = scalar_select 0, %s8, %s6
  %10 = sst [smem:[#allocation3]] %s0
  %11 = sst [smem:[#allocation4]] %s1
  %s12 = sshll.u32 %s2, 4
  %s13 = int_to_ptr.vmem [resolvable:$true] %s12
  %15 = dma.vmem_to_smem %s13, 16, [#allocation5], [#allocation2]
  %s16 = sshll.u32 %s3, 4
  %s17 = int_to_ptr.vmem [resolvable:$true] %s16
  %19 = dma.vmem_to_smem %s17, 16, [#allocation6], [#allocation2]
  %20 = dma.done [#allocation2], 32
  %21 = sfence
  $region1: #{regularization_loss.1} parent=0
    #allocation7 [shape = 'u8[512]{0}', space=smem, size = 0x200, scoped, tag = 'output window, operand 0, single buffered']
    #allocation8 [shape = 's32[1]{0}', space=sflag, size = 0x4, scoped, tag = 'scoped memory for regularization_loss.1']
    %22 = vsyncpa [#allocation8], 0
    // Predicated region
    $region2: #{regularization_loss.1} parent=1 // pred_check
      _
    $region3: #{regularization_loss.1} parent=1 // pred_check_branch
      %24 = sbr.rel (0) target = $region5
    $region4: #{regularization_loss.1} parent=1 // pred_region
      _
    $region5: #{regularization_loss.1} parent=1 // pred_fallthru
      _
    %v25 = vld [vmem:[%s4] sm:$0xff]
    %v26 = vmul.f32 %v25, %v25
    %s27 = sld [smem:[#allocation3]]
    %s28 = sld [smem:[#allocation4]]
    %s29 = smul.u32 0, 1024
    %s30 = sadd.s32 %s29, 1024
    %p31 = scmp.eq.s32.totalorder %s27, %s28
    %s32 = sld [smem:[#allocation5 + %s27]]
    %p33 = scmp.le.s32.totalorder %s32, %s29
    %s34 = sadd.s32 %s27, 1
    %s35 = sld [smem:[#allocation5 + %s34]]
    %p36 = scmp.ge.s32.totalorder %s35, %s30
    %p37 = pnand %p33, %p36
    %p38 = pneg %p37
    %p39 = pnand %p31, %p38
    %p40 = pneg %p39
    // Predicated region
    $region6: #{regularization_loss.1} parent=1 // pred_check
      _
    $region7: #{regularization_loss.1} parent=1 // pred_check_branch
      %42 = sbr.rel (%p39) target = $region9
    $region8: #{regularization_loss.1} parent=1 // pred_region
      %43 = vadd.xlane.f32.xlu0 %v26
      %v44 = vpop.xlane.xlu0 %43
      %v45 = vrot.slane %v44, 4
      %v46 = vadd.f32 %v44, %v45
      %v47 = vrot.slane %v46, 2
      %v48 = vadd.f32 %v46, %v47
      %v49 = vrot.slane %v48, 1
      %v50 = vadd.f32 %v48, %v49
      %s51 = vtos %v50
      %s52 = sld [smem:[#allocation7 + %s27]]
      %s53 = sld [smem:[#allocation6 + %s27]]
      %p54 = scmp.eq.s32.totalorder %s53, 0
      %s55 = sadd.f32 %s52, %s51
      %s56 = scalar_select %p54, %s51, %s55
      %s57 = scalar_lea.smem [#allocation7], %s27
      %58 = sst [smem:[%s57]] %s56
    $region9: #{regularization_loss.1} parent=1 // pred_fallthru
      _
    %p59 = pneg %p40
    // Predicated region
    $region10: #{regularization_loss.1} parent=1 // pred_check
      _
    $region11: #{regularization_loss.1} parent=1 // pred_check_branch
      %61 = sbr.rel (%p40) target = $region13
    $region12: #{regularization_loss.1} parent=1 // pred_region
      %v62 = vlaneseq
      %v63 = vshrl.u32 %v62, 7
      %v64 = vlaneseq
      %v65 = vand.u32 %v64, 127
      %v66 = vmul.u32 %v63, 128
      %v67 = vstv %s29
      %v68 = vadd.s32 %v67, %v66
      %v69 = vadd.s32 %v68, %v65
      %s70 = sadd.s32 %s28, 1
      // While loop
      $region14: #{regularization_loss.1} parent=12 // loop_pre_header
        _
      $region15: #{regularization_loss.1} parent=12 // loop_header
        %s72 = sphi %s27, %s74
        %p73 = scmp.ge.s32.totalorder %s72, %s70
      $region16: #{regularization_loss.1} parent=12 // loop_header_branch
        %76 = sbr.rel (%p73) target = $region20
      $region17: #{regularization_loss.1} parent=12 // loop_body
        %s77 = sld [smem:[#allocation5 + %s72]]
        %s78 = sadd.s32 %s72, 1
        %s79 = sld [smem:[#allocation5 + %s78]]
        %v80 = vstv %s77
        %vm81 = vcmp.ge.s32.totalorder %v69, %v80
        %v82 = vstv %s79
        %vm83 = vcmp.lt.s32.totalorder %v69, %v82
        %vm84 = vmand %vm81, %vm83
        %v85 = vsel %vm84, %v26, 0.0
        %86 = vadd.xlane.f32.xlu0 %v85
        %v87 = vpop.xlane.xlu0 %86
        %v88 = vrot.slane %v87, 4
        %v89 = vadd.f32 %v87, %v88
        %v90 = vrot.slane %v89, 2
        %v91 = vadd.f32 %v89, %v90
        %v92 = vrot.slane %v91, 1
        %v93 = vadd.f32 %v91, %v92
        %s94 = vtos %v93
        %s95 = sld [smem:[#allocation7 + %s72]]
        %s96 = sld [smem:[#allocation6 + %s72]]
        %p97 = scmp.eq.s32.totalorder %s96, 0
        %s98 = sadd.f32 %s95, %s94
        %s99 = scalar_select %p97, %s94, %s98
        %s100 = scalar_lea.smem [#allocation7], %s72
        %101 = sst [smem:[%s100]] %s99
      $region18: #{regularization_loss.1} parent=12 // loop_footer
        %s74 = sadd.s32 %s72, 1
      $region19: #{regularization_loss.1} parent=12 // loop_footer_branch
        %71 = sbr.rel target = $region15
      $region20: #{regularization_loss.1} parent=12 // loop_exit
        _
    $region13: #{regularization_loss.1} parent=1 // pred_fallthru
      _
    // Predicated region
    $region21: #{regularization_loss.1} parent=1 // pred_check
      _
    $region22: #{regularization_loss.1} parent=1 // pred_check_branch
      %103 = sbr.rel (0) target = $region24
    $region23: #{regularization_loss.1} parent=1 // pred_region
      %s105 = ssub.s32 16, 16
      %106 = vsyncadd [#allocation8], %s105
      %s108 = sshll.u32 %s5, 4
      %s109 = int_to_ptr.vmem [resolvable:$true] %s108
      %111 = dma.smem_to_vmem [#allocation7], 16, %s109, [#allocation8]
    $region24: #{regularization_loss.1} parent=1 // pred_fallthru
      _
    // Predicated region
    $region25: #{regularization_loss.1} parent=1 // pred_check
      _
    $region26: #{regularization_loss.1} parent=1 // pred_check_branch
      %113 = sbr.rel (0) target = $region28
    $region27: #{regularization_loss.1} parent=1 // pred_region
      %114 = dma.done [#allocation8], 16
    $region28: #{regularization_loss.1} parent=1 // pred_fallthru
      _
    %115 = sfence
    %116 = vsyncpa [#allocation8], 1

</llo_original>
